<compile_context>
chip_gen: v5e
topology: v5e:2x2
jax: 0.10.0
libtpu: 0.0.40
codegen_flags: <defaults>
</compile_context>

<pallas_src>
import functools
import math

import jax
import jax.numpy as jnp
from jax.experimental import pallas as pl
from jax.experimental.pallas import tpu as pltpu


# ---------------------------------------------------------------------------
# host-side parameter construction (mirrors _fspecial_gauss_1d)
# ---------------------------------------------------------------------------
def fspecial_gauss_1d(size, sigma):
    coords = jnp.arange(size, dtype=jnp.float32) - (size // 2)
    g = jnp.exp(-(coords ** 2) / (2.0 * sigma ** 2))
    return g / jnp.sum(g)


def conv_matrix(length, g):
    """Matrix M of shape (length-k+1, length) s.t. (M @ a)[i] = sum_j g[j]*a[i+j]."""
    k = g.shape[0]
    out_len = length - k + 1
    rows = jnp.arange(out_len)[:, None]
    cols = jnp.arange(length)[None, :]
    idx = cols - rows
    valid = (idx >= 0) & (idx < k)
    return jnp.where(valid, g[jnp.clip(idx, 0, k - 1)], 0.0).astype(jnp.float32)


LANE_ALIGN_PREFS = (256, 128)   # prefer full 256-wide MXU contraction (v6e/v7x)
TARGET_LANES = 1024             # pack up to ~1024 lanes per grid step


def _choose_pack(NC, W):
    """How many images B to pack along the lane axis per grid step.

    Returns (B, NCp, G): B images per step, padded image count, grid size.
    """
    if W >= 128:
        # Already lane-dense: B == 1 -> no host-side packing transpose, grid
        # over images (G == NC >= 2 uses both v7x TensorCores).
        return 1, NC, NC
    step = None
    for align in LANE_ALIGN_PREFS:
        s = align // math.gcd(align, W)      # min images so B*W % align == 0
        if s <= NC:
            step = s
            break
    if step is None:
        return NC, NC, 1                     # tiny problem: one full-extent slab
    groups = -(-NC // step)                  # aligned image groups available
    per_step = max(1, min(TARGET_LANES // (step * W), groups))
    if groups >= 2:
        # keep >= 2 grid steps when the data allows (v7x dual TensorCore)
        per_step = min(per_step, -(-groups // 2))
    B = per_step * step
    G = -(-NC // B)
    return B, G * B, G


def _vmem_estimate(H, L, Lo, Hop, B, in_itemsize):
    """Rough per-step VMEM footprint in bytes (inputs double-buffered)."""
    f32 = 4
    live = (3 * H * L + H * Lo + 15 * Hop * Lo) * f32     # maps/t/elementwise temps
    inputs = 2 * 2 * H * L * in_itemsize                  # x, y double-buffered
    consts = 2 * (L * Lo + Hop * H + Lo * B) * f32        # gw, ght, sel (x2 buffers)
    return live + inputs + consts + (1 << 20)


# ---------------------------------------------------------------------------
# Pallas kernel: one (H, L=B*W) slab of B packed images per grid step
# ---------------------------------------------------------------------------
def ssim_kernel(x_ref, y_ref, gw_ref, ght_ref, sel_ref, out_ref, *, C1, C2, Ho, Hop):
    x = x_ref[...].astype(jnp.float32)       # (H, L)  cast in-kernel (no host copy)
    y = y_ref[...].astype(jnp.float32)

    gw = gw_ref[...]                         # (L, Lo)  block-diag column blur
    ght = ght_ref[...]                       # (Hop, H) shared row blur (zero pad rows)

    def blur(m):
        # separable Gaussian blur, all on the MXU
        t = jnp.dot(m, gw, preferred_element_type=jnp.float32)        # (H, Lo)
        return jnp.dot(ght, t, preferred_element_type=jnp.float32)    # (Hop, Lo)

    mu1 = blur(x)
    mu2 = blur(y)
    e_xx = blur(x * x)
    e_yy = blur(y * y)
    e_xy = blur(x * y)

    mu1_sq = mu1 * mu1
    mu2_sq = mu2 * mu2
    mu1_mu2 = mu1 * mu2
    sigma1_sq = e_xx - mu1_sq
    sigma2_sq = e_yy - mu2_sq
    sigma12 = e_xy - mu1_mu2

    def recip(d):
        r = pl.reciprocal(d, approx=True)        # EUP slot (otherwise idle)
        return r * (2.0 - d * r)                 # one Newton step -> ~f32 accurate

    cs_map = (2.0 * sigma12 + C2) * recip(sigma1_sq + sigma2_sq + C2)
    ssim_map = (2.0 * mu1_mu2 + C1) * recip(mu1_sq + mu2_sq + C1) * cs_map

    # Fold the (Hop - Ho) pad-row mask and the spatial mean into two matmuls:
    #   (1, Hop) @ (Hop, Lo) @ (Lo, B); sel already carries 1/(Ho*Wo).
    rowv = (jax.lax.broadcasted_iota(jnp.int32, (1, Hop), 1) < Ho).astype(jnp.float32)
    per_img = jnp.dot(
        rowv,
        jnp.dot(ssim_map, sel_ref[...], preferred_element_type=jnp.float32),
        preferred_element_type=jnp.float32)      # (1, B)
    out_ref[...] = per_img


# ---------------------------------------------------------------------------
# wrapper: packing, constant matrices, pallas_call
# ---------------------------------------------------------------------------
def ssim_pallas(X, Y, *, data_range=255.0, win_1d=None, K=(0.01, 0.03)):
    assert X.shape == Y.shape and X.ndim == 4
    N, C, H, W = map(int, X.shape)
    win_size = int(win_1d.shape[0])
    assert win_size % 2 == 1
    # TODO(synk): the PyTorch path warns and skips the blur along a spatial dim
    # whose size < win_size; that branch is not reproduced here.
    assert H >= win_size and W >= win_size
    Ho, Wo = H - win_size + 1, W - win_size + 1
    Hop = -(-Ho // 8) * 8                    # 8-aligned row-blur output height

    NC = N * C
    B, NCp, G = _choose_pack(NC, W)
    L, Lo = B * W, B * Wo

    # Shared separable-blur matrices (f32); NO kron of the row blur any more.
    gw1 = conv_matrix(W, win_1d).T                                   # (W, Wo)
    ght = jnp.pad(conv_matrix(H, win_1d), ((0, Hop - Ho), (0, 0)))   # (Hop, H)
    sel1 = jnp.full((Wo, 1), 1.0 / (Ho * Wo), jnp.float32)
    if B > 1:
        eye_b = jnp.eye(B, dtype=jnp.float32)
        gw = jnp.kron(eye_b, gw1)                                    # (L, Lo)
        sel = jnp.kron(eye_b, sel1)                                  # (Lo, B)
    else:
        gw, sel = gw1, sel1

    K1, K2 = K
    C1 = float((K1 * data_range) ** 2)
    C2 = float((K2 * data_range) ** 2)
    kernel = functools.partial(ssim_kernel, C1=C1, C2=C2, Ho=Ho, Hop=Hop)

    if B == 1:
        # Large-W path: no host-side pack/transpose (saves a full HBM pass).
        xs = X.reshape(NC, H, W)
        ys = Y.reshape(NC, H, W)
        x_spec = pl.BlockSpec((None, H, W), lambda i: (i, 0, 0))
    else:
        # Small-W path: pack B images along lanes (images are small here, so
        # the host relayout pass is cheap).
        # TODO(synk): in-kernel (B,H,W)->(H,B*W) relayout not implemented.
        x_img = X.reshape(NC, H, W)
        y_img = Y.reshape(NC, H, W)
        if NCp > NC:
            pad = ((0, NCp - NC), (0, 0), (0, 0))
            x_img = jnp.pad(x_img, pad)
            y_img = jnp.pad(y_img, pad)
        xs = jnp.transpose(x_img, (1, 0, 2)).reshape(H, NCp * W)
        ys = jnp.transpose(y_img, (1, 0, 2)).reshape(H, NCp * W)
        x_spec = pl.BlockSpec((H, L), lambda i: (0, i))

    # Constants are small now (no 5x kron); default double-buffering is cheap.
    # TODO(synk): single-buffering them via pipeline_mode=pl.Buffered(1) skipped.
    const_specs = [
        pl.BlockSpec((L, Lo), lambda i: (0, 0)),
        pl.BlockSpec((Hop, H), lambda i: (0, 0)),
        pl.BlockSpec((Lo, B), lambda i: (0, 0)),
    ]
    out_spec = pl.BlockSpec((None, 1, B), lambda i: (i, 0, 0))

    in_itemsize = jnp.dtype(X.dtype).itemsize
    est = _vmem_estimate(H, L, Lo, Hop, B, in_itemsize)
    try:
        phys_vmem = int(pltpu.get_tpu_info().vmem_capacity_bytes)
    except Exception:
        phys_vmem = 64 << 20        # conservative (v7x physical VMEM per TC)
    vmem_limit = int(min(phys_vmem * 3 // 4, max(32 << 20, 2 * est)))

    cost = pl.CostEstimate(
        flops=int(G * (10 * (H * L * Lo + Hop * H * Lo) + 25 * Hop * Lo
                       + 2 * Hop * Lo * B)),
        transcendentals=int(G * 2 * Hop * Lo),
        bytes_accessed=int(2 * NCp * H * W * in_itemsize
                           + (L * Lo + Hop * H + Lo * B) * 4 + G * B * 4),
    )

    out = pl.pallas_call(
        kernel,
        out_shape=jax.ShapeDtypeStruct((G, 1, B), jnp.float32),
        grid_spec=pltpu.PrefetchScalarGridSpec(
            num_scalar_prefetch=0,
            grid=(G,),
            in_specs=[x_spec, x_spec, *const_specs],
            out_specs=out_spec,
        ),
        # per-image outputs -> no cross-step accumulator -> grid can run in
        # parallel across both TensorCores on v7x.
        compiler_params=pltpu.CompilerParams(
            dimension_semantics=("parallel",),
            vmem_limit_bytes=vmem_limit,
        ),
        cost_estimate=cost,
    )(xs, ys, gw, ght, sel)

    # (G, 1, B) -> per-image SSIM (== ssim_per_channel), dropping pad images.
    return out.reshape(G * B)[:NC].reshape(N, C)


# ---------------------------------------------------------------------------
# Module-like wrapper (mirrors SSIM.__init__ defaults)
# ---------------------------------------------------------------------------
class SSIMPallas:
    def __init__(self, data_range=255, size_average=True, win_size=11,
                 win_sigma=1.5, channel=3, K=(0.01, 0.03),
                 nonnegative_ssim=False):
        self.data_range = float(data_range)
        self.size_average = size_average
        self.win_size = win_size
        self.win_1d = fspecial_gauss_1d(win_size, win_sigma)
        self.channel = channel
        self.K = K
        self.nonnegative_ssim = nonnegative_ssim
        # TODO(synk): not_valid_mask (masked SSIM) path not implemented; the
        # module default not_valid_mask=None is the path reproduced here.

    def __call__(self, X, Y):
        ssim_per_channel = ssim_pallas(X, Y, data_range=self.data_range,
                                       win_1d=self.win_1d, K=self.K)
        if self.nonnegative_ssim:
            ssim_per_channel = jnp.maximum(ssim_per_channel, 0.0)
        if self.size_average:
            return ssim_per_channel.mean()
        return ssim_per_channel.mean(axis=1)


# ---------------------------------------------------------------------------
# plain-JAX reference (mirrors the PyTorch code path) for verification
# ---------------------------------------------------------------------------
def _gaussian_filter_ref(x, g):
    N, C, H, W = x.shape
    k = g.shape[0]
    dn = ("NCHW", "OIHW", "NCHW")
    wh = jnp.broadcast_to(g.reshape(1, 1, k, 1), (C, 1, k, 1))
    ww = jnp.broadcast_to(g.reshape(1, 1, 1, k), (C, 1, 1, k))
    out = jax.lax.conv_general_dilated(x, wh, (1, 1), "VALID",
                                       dimension_numbers=dn,
                                       feature_group_count=C)
    out = jax.lax.conv_general_dilated(out, ww, (1, 1), "VALID",
                                       dimension_numbers=dn,
                                       feature_group_count=C)
    return out


def ssim_reference(X, Y, data_range, g, K):
    K1, K2 = K
    C1 = (K1 * data_range) ** 2
    C2 = (K2 * data_range) ** 2
    mu1 = _gaussian_filter_ref(X, g)
    mu2 = _gaussian_filter_ref(Y, g)
    mu1_sq, mu2_sq, mu1_mu2 = mu1 ** 2, mu2 ** 2, mu1 * mu2
    sigma1_sq = _gaussian_filter_ref(X * X, g) - mu1_sq
    sigma2_sq = _gaussian_filter_ref(Y * Y, g) - mu2_sq
    sigma12 = _gaussian_filter_ref(X * Y, g) - mu1_mu2
    cs_map = (2 * sigma12 + C2) / (sigma1_sq + sigma2_sq + C2)
    ssim_map = (2 * mu1_mu2 + C1) / (mu1_sq + mu2_sq + C1) * cs_map
    ssim_per_channel = ssim_map.reshape(*ssim_map.shape[:2], -1).mean(-1)
    return ssim_per_channel.mean()


if __name__ == "__main__":
    key = jax.random.PRNGKey(0)
    k1, k2, k3, k4 = jax.random.split(key, 4)

    # Case 1: small images -> packed (lane-stacked) path.
    N, C, H, W = 2, 4, 16, 16
    X = jax.random.uniform(k1, (N, C, H, W), dtype=jnp.float32) * 255.0
    Y = jnp.clip(X + 20.0 * jax.random.normal(k2, (N, C, H, W),
                                              dtype=jnp.float32), 0.0, 255.0)
    model = SSIMPallas(data_range=255, size_average=True, win_size=11,
                       win_sigma=1.5, channel=C)
    out = jax.block_until_ready(model(X, Y))
    ref = ssim_reference(X, Y, 255.0, model.win_1d, model.K)
    assert jnp.allclose(out, ref, rtol=2e-3, atol=2e-4), (out, ref)

    # Case 2: wide images -> unpacked (B == 1) path, grid over images.
    N2, C2, H2, W2 = 1, 2, 16, 128
    X2 = jax.random.uniform(k3, (N2, C2, H2, W2), dtype=jnp.float32) * 255.0
    Y2 = jnp.clip(X2 + 20.0 * jax.random.normal(k4, (N2, C2, H2, W2),
                                                dtype=jnp.float32), 0.0, 255.0)
    model2 = SSIMPallas(data_range=255, size_average=True, win_size=11,
                        win_sigma=1.5, channel=C2)
    out2 = jax.block_until_ready(model2(X2, Y2))
    ref2 = ssim_reference(X2, Y2, 255.0, model2.win_1d, model2.K)
    assert jnp.allclose(out2, ref2, rtol=2e-3, atol=2e-4), (out2, ref2)

    print("KERNEL_OK")
</pallas_src>

<mosaic_0001>
module attributes {stable_mosaic.version = 11 : i64} {
  func.func @ssim_kernel(%arg0: i32, %arg1: memref<16x128xf32, #tpu.memory_space<vmem>>, %arg2: memref<16x128xf32, #tpu.memory_space<vmem>>, %arg3: memref<128x48xf32, #tpu.memory_space<vmem>>, %arg4: memref<8x16xf32, #tpu.memory_space<vmem>>, %arg5: memref<48x8xf32, #tpu.memory_space<vmem>>, %arg6: memref<1x1x8xf32, #tpu.memory_space<vmem>>) attributes {dimension_semantics = [#tpu.dimension_semantics<parallel>], iteration_bounds = array<i64: 1>, scalar_prefetch = 0 : i64, scratch_operands = 0 : i64, tpu.core_type = #tpu.core_type<tc>, window_params = [{transform_indices = @transform_0, window_bounds = array<i64: 16, 128>}, {transform_indices = @transform_1, window_bounds = array<i64: 16, 128>}, {pipeline_mode = #tpu.pipeline_mode<synchronous>, transform_indices = @transform_2, window_bounds = array<i64: 128, 48>}, {pipeline_mode = #tpu.pipeline_mode<synchronous>, transform_indices = @transform_3, window_bounds = array<i64: 8, 16>}, {pipeline_mode = #tpu.pipeline_mode<synchronous>, transform_indices = @transform_4, window_bounds = array<i64: 48, 8>}, {transform_indices = @transform_5, window_bounds = array<i64: 1, 1, 8>}]} {
    %c0 = arith.constant 0 : index
    %c0_0 = arith.constant 0 : index
    %0 = vector.load %arg1[%c0, %c0_0] : memref<16x128xf32, #tpu.memory_space<vmem>>, vector<16x128xf32>
    %c0_1 = arith.constant 0 : index
    %c0_2 = arith.constant 0 : index
    %1 = vector.load %arg2[%c0_1, %c0_2] : memref<16x128xf32, #tpu.memory_space<vmem>>, vector<16x128xf32>
    %c0_3 = arith.constant 0 : index
    %c0_4 = arith.constant 0 : index
    %2 = vector.load %arg3[%c0_3, %c0_4] : memref<128x48xf32, #tpu.memory_space<vmem>>, vector<128x48xf32>
    %c0_5 = arith.constant 0 : index
    %c0_6 = arith.constant 0 : index
    %3 = vector.load %arg4[%c0_5, %c0_6] : memref<8x16xf32, #tpu.memory_space<vmem>>, vector<8x16xf32>
    %cst = arith.constant dense<0.000000e+00> : vector<16x48xf32>
    %4 = tpu.matmul %0, %2, %cst {dimension_numbers = #tpu.dot_dimension_numbers<[1], [0], [0], [1], [0, 0, 1, 1], [], []>} : vector<16x128xf32>, vector<128x48xf32>, vector<16x48xf32> -> vector<16x48xf32>
    %cst_7 = arith.constant dense<0.000000e+00> : vector<8x48xf32>
    %5 = tpu.matmul %3, %4, %cst_7 {dimension_numbers = #tpu.dot_dimension_numbers<[1], [0], [0], [1], [0, 0, 1, 1], [], []>} : vector<8x16xf32>, vector<16x48xf32>, vector<8x48xf32> -> vector<8x48xf32>
    %cst_8 = arith.constant dense<0.000000e+00> : vector<16x48xf32>
    %6 = tpu.matmul %1, %2, %cst_8 {dimension_numbers = #tpu.dot_dimension_numbers<[1], [0], [0], [1], [0, 0, 1, 1], [], []>} : vector<16x128xf32>, vector<128x48xf32>, vector<16x48xf32> -> vector<16x48xf32>
    %cst_9 = arith.constant dense<0.000000e+00> : vector<8x48xf32>
    %7 = tpu.matmul %3, %6, %cst_9 {dimension_numbers = #tpu.dot_dimension_numbers<[1], [0], [0], [1], [0, 0, 1, 1], [], []>} : vector<8x16xf32>, vector<16x48xf32>, vector<8x48xf32> -> vector<8x48xf32>
    %8 = arith.mulf %0, %0 : vector<16x128xf32>
    %cst_10 = arith.constant dense<0.000000e+00> : vector<16x48xf32>
    %9 = tpu.matmul %8, %2, %cst_10 {dimension_numbers = #tpu.dot_dimension_numbers<[1], [0], [0], [1], [0, 0, 1, 1], [], []>} : vector<16x128xf32>, vector<128x48xf32>, vector<16x48xf32> -> vector<16x48xf32>
    %cst_11 = arith.constant dense<0.000000e+00> : vector<8x48xf32>
    %10 = tpu.matmul %3, %9, %cst_11 {dimension_numbers = #tpu.dot_dimension_numbers<[1], [0], [0], [1], [0, 0, 1, 1], [], []>} : vector<8x16xf32>, vector<16x48xf32>, vector<8x48xf32> -> vector<8x48xf32>
    %11 = arith.mulf %1, %1 : vector<16x128xf32>
    %cst_12 = arith.constant dense<0.000000e+00> : vector<16x48xf32>
    %12 = tpu.matmul %11, %2, %cst_12 {dimension_numbers = #tpu.dot_dimension_numbers<[1], [0], [0], [1], [0, 0, 1, 1], [], []>} : vector<16x128xf32>, vector<128x48xf32>, vector<16x48xf32> -> vector<16x48xf32>
    %cst_13 = arith.constant dense<0.000000e+00> : vector<8x48xf32>
    %13 = tpu.matmul %3, %12, %cst_13 {dimension_numbers = #tpu.dot_dimension_numbers<[1], [0], [0], [1], [0, 0, 1, 1], [], []>} : vector<8x16xf32>, vector<16x48xf32>, vector<8x48xf32> -> vector<8x48xf32>
    %14 = arith.mulf %0, %1 : vector<16x128xf32>
    %cst_14 = arith.constant dense<0.000000e+00> : vector<16x48xf32>
    %15 = tpu.matmul %14, %2, %cst_14 {dimension_numbers = #tpu.dot_dimension_numbers<[1], [0], [0], [1], [0, 0, 1, 1], [], []>} : vector<16x128xf32>, vector<128x48xf32>, vector<16x48xf32> -> vector<16x48xf32>
    %cst_15 = arith.constant dense<0.000000e+00> : vector<8x48xf32>
    %16 = tpu.matmul %3, %15, %cst_15 {dimension_numbers = #tpu.dot_dimension_numbers<[1], [0], [0], [1], [0, 0, 1, 1], [], []>} : vector<8x16xf32>, vector<16x48xf32>, vector<8x48xf32> -> vector<8x48xf32>
    %17 = arith.mulf %5, %5 : vector<8x48xf32>
    %18 = arith.mulf %7, %7 : vector<8x48xf32>
    %19 = arith.mulf %5, %7 : vector<8x48xf32>
    %20 = arith.subf %10, %17 : vector<8x48xf32>
    %21 = arith.subf %13, %18 : vector<8x48xf32>
    %22 = arith.subf %16, %19 : vector<8x48xf32>
    %cst_16 = arith.constant 2.000000e+00 : f32
    %23 = vector.broadcast %cst_16 : f32 to vector<8x48xf32>
    %24 = arith.mulf %23, %22 : vector<8x48xf32>
    %cst_17 = arith.constant 5.852250e+01 : f32
    %25 = vector.broadcast %cst_17 : f32 to vector<8x48xf32>
    %26 = arith.addf %24, %25 : vector<8x48xf32>
    %27 = arith.addf %20, %21 : vector<8x48xf32>
    %cst_18 = arith.constant 5.852250e+01 : f32
    %28 = vector.broadcast %cst_18 : f32 to vector<8x48xf32>
    %29 = arith.addf %27, %28 : vector<8x48xf32>
    %30 = tpu.reciprocal %29 {approx = true} : vector<8x48xf32> -> vector<8x48xf32>
    %31 = arith.mulf %29, %30 : vector<8x48xf32>
    %cst_19 = arith.constant 2.000000e+00 : f32
    %32 = vector.broadcast %cst_19 : f32 to vector<8x48xf32>
    %33 = arith.subf %32, %31 : vector<8x48xf32>
    %34 = arith.mulf %30, %33 : vector<8x48xf32>
    %35 = arith.mulf %26, %34 : vector<8x48xf32>
    %cst_20 = arith.constant 2.000000e+00 : f32
    %36 = vector.broadcast %cst_20 : f32 to vector<8x48xf32>
    %37 = arith.mulf %36, %19 : vector<8x48xf32>
    %cst_21 = arith.constant 6.502500e+00 : f32
    %38 = vector.broadcast %cst_21 : f32 to vector<8x48xf32>
    %39 = arith.addf %37, %38 : vector<8x48xf32>
    %40 = arith.addf %17, %18 : vector<8x48xf32>
    %cst_22 = arith.constant 6.502500e+00 : f32
    %41 = vector.broadcast %cst_22 : f32 to vector<8x48xf32>
    %42 = arith.addf %40, %41 : vector<8x48xf32>
    %43 = tpu.reciprocal %42 {approx = true} : vector<8x48xf32> -> vector<8x48xf32>
    %44 = arith.mulf %42, %43 : vector<8x48xf32>
    %cst_23 = arith.constant 2.000000e+00 : f32
    %45 = vector.broadcast %cst_23 : f32 to vector<8x48xf32>
    %46 = arith.subf %45, %44 : vector<8x48xf32>
    %47 = arith.mulf %43, %46 : vector<8x48xf32>
    %48 = arith.mulf %39, %47 : vector<8x48xf32>
    %49 = arith.mulf %48, %35 : vector<8x48xf32>
    %50 = tpu.iota {dimensions = array<i32: 1>} : vector<1x8xi32>
    %c6_i32 = arith.constant 6 : i32
    %51 = vector.broadcast %c6_i32 : i32 to vector<1x8xi32>
    %52 = arith.cmpi slt, %50, %51 : vector<1x8xi32>
    %53 = arith.extui %52 : vector<1x8xi1> to vector<1x8xi32>
    %54 = arith.sitofp %53 : vector<1x8xi32> to vector<1x8xf32>
    %c0_24 = arith.constant 0 : index
    %c0_25 = arith.constant 0 : index
    %55 = vector.load %arg5[%c0_24, %c0_25] : memref<48x8xf32, #tpu.memory_space<vmem>>, vector<48x8xf32>
    %cst_26 = arith.constant dense<0.000000e+00> : vector<8x8xf32>
    %56 = tpu.matmul %49, %55, %cst_26 {dimension_numbers = #tpu.dot_dimension_numbers<[1], [0], [0], [1], [0, 0, 1, 1], [], []>} : vector<8x48xf32>, vector<48x8xf32>, vector<8x8xf32> -> vector<8x8xf32>
    %cst_27 = arith.constant dense<0.000000e+00> : vector<1x8xf32>
    %57 = tpu.matmul %54, %56, %cst_27 {dimension_numbers = #tpu.dot_dimension_numbers<[1], [0], [0], [1], [0, 0, 1, 1], [], []>} : vector<1x8xf32>, vector<8x8xf32>, vector<1x8xf32> -> vector<1x8xf32>
    %c0_28 = arith.constant 0 : index
    %c0_29 = arith.constant 0 : index
    %c0_30 = arith.constant 0 : index
    %58 = vector.load %arg6[%c0_28, %c0_29, %c0_30] : memref<1x1x8xf32, #tpu.memory_space<vmem>>, vector<1x1x8xf32>
    %59 = vector.shape_cast %58 : vector<1x1x8xf32> to vector<1x8xf32>
    %60 = vector.shape_cast %57 : vector<1x8xf32> to vector<1x1x8xf32>
    tpu.vector_store %arg6[%c0_28, %c0_29, %c0_30], %60 {strides = array<i32>} : memref<1x1x8xf32, #tpu.memory_space<vmem>>, vector<1x1x8xf32>,
    return
  }
  func.func @transform_0(%arg0: i32) -> (i32, i32) {
    %c0_i32 = arith.constant 0 : i32
    %c0_i32_0 = arith.constant 0 : i32
    return %c0_i32, %arg0 : i32, i32
  }
  func.func @transform_1(%arg0: i32) -> (i32, i32) {
    %c0_i32 = arith.constant 0 : i32
    %c0_i32_0 = arith.constant 0 : i32
    return %c0_i32, %arg0 : i32, i32
  }
  func.func @transform_2(%arg0: i32) -> (i32, i32) {
    %c0_i32 = arith.constant 0 : i32
    %c0_i32_0 = arith.constant 0 : i32
    %c0_i32_1 = arith.constant 0 : i32
    return %c0_i32, %c0_i32_0 : i32, i32
  }
  func.func @transform_3(%arg0: i32) -> (i32, i32) {
    %c0_i32 = arith.constant 0 : i32
    %c0_i32_0 = arith.constant 0 : i32
    %c0_i32_1 = arith.constant 0 : i32
    return %c0_i32, %c0_i32_0 : i32, i32
  }
  func.func @transform_4(%arg0: i32) -> (i32, i32) {
    %c0_i32 = arith.constant 0 : i32
    %c0_i32_0 = arith.constant 0 : i32
    %c0_i32_1 = arith.constant 0 : i32
    return %c0_i32, %c0_i32_0 : i32, i32
  }
  func.func @transform_5(%arg0: i32) -> (i32, i32, i32) {
    %c0_i32 = arith.constant 0 : i32
    %c0_i32_0 = arith.constant 0 : i32
    %c0_i32_1 = arith.constant 0 : i32
    return %arg0, %c0_i32, %c0_i32_0 : i32, i32, i32
  }
}

</mosaic_0001>

<llo_original>
// kernel: tpu_custom_call.1
$region0: #{tpu_custom_call.1}
  #allocation0 [shape = 'u32[]', space=smem, size = 0x4, offset = 0x4, fixed_abs, tag = 'smem constant byte address 0x4 - core index']
  #allocation1 [shape = 'u32[72,128]{1,0:T(1,128)}', space=vmem, size = 0x9000, scoped, tag = 'internal scratch']
  %s0 = inlined_call_operand.vmem [shape: f32[16,128], index: 0, kind: input, shape index: {}]
  %s1 = inlined_call_operand.vmem [shape: f32[16,128], index: 1, kind: input, shape index: {}]
  %s2 = inlined_call_operand.vmem [shape: f32[128,48], index: 2, kind: input, shape index: {}]
  %s3 = inlined_call_operand.vmem [shape: f32[8,16], index: 3, kind: input, shape index: {}]
  %s4 = inlined_call_operand.vmem [shape: f32[48,8], index: 4, kind: input, shape index: {}]
  %s5 = inlined_call_operand.hbm [shape: f32[1,1,8], index: 5, kind: output, shape index: {}]
  %s6 = sld [smem:[#allocation0]]
  $region30: #{tpu_custom_call.1} parent=0
    _
  %s8 = ssub.s32 1, %s6
  %s9 = scalar_select 0, %s8, %s6
  $region1: #{tpu_custom_call.1} parent=0
    #allocation2 [shape = 'u8[512]{0}', space=vmem, size = 0x400, scoped, tag = 'output window, operand 0, single buffered']
    #allocation3 [shape = 's32[1]{0}', space=sflag, size = 0x4, scoped, tag = 'scoped memory for tpu_custom_call.1']
    %10 = vsyncpa [#allocation3], 0
    // Predicated region
    $region2: #{tpu_custom_call.1} parent=1 // pred_check
      _
    $region3: #{tpu_custom_call.1} parent=1 // pred_check_branch
      %12 = sbr.rel (0) target = $region5
    $region4: #{tpu_custom_call.1} parent=1 // pred_region
      _
    $region5: #{tpu_custom_call.1} parent=1 // pred_fallthru
      _
    // Predicated region
    $region6: #{tpu_custom_call.1} parent=1 // pred_check
      _
    $region7: #{tpu_custom_call.1} parent=1 // pred_check_branch
      %14 = sbr.rel (0) target = $region9
    $region8: #{tpu_custom_call.1} parent=1 // pred_region
      _
    $region9: #{tpu_custom_call.1} parent=1 // pred_fallthru
      _
    // Predicated region
    $region10: #{tpu_custom_call.1} parent=1 // pred_check
      _
    $region11: #{tpu_custom_call.1} parent=1 // pred_check_branch
      %16 = sbr.rel (0) target = $region13
    $region12: #{tpu_custom_call.1} parent=1 // pred_region
      _
    $region13: #{tpu_custom_call.1} parent=1 // pred_fallthru
      _
    // Predicated region
    $region14: #{tpu_custom_call.1} parent=1 // pred_check
      _
    $region15: #{tpu_custom_call.1} parent=1 // pred_check_branch
      %18 = sbr.rel (0) target = $region17
    $region16: #{tpu_custom_call.1} parent=1 // pred_region
      _
    $region17: #{tpu_custom_call.1} parent=1 // pred_fallthru
      _
    // Predicated region
    $region18: #{tpu_custom_call.1} parent=1 // pred_check
      _
    $region19: #{tpu_custom_call.1} parent=1 // pred_check_branch
      %20 = sbr.rel (0) target = $region21
    $region20: #{tpu_custom_call.1} parent=1 // pred_region
      _
    $region21: #{tpu_custom_call.1} parent=1 // pred_fallthru
      _
    %v21 = vld [vmem:[%s0] sm:$0xff]
    %v22 = vld [vmem:[%s0 + $0x8] sm:$0xff]
    %v23 = vld [vmem:[%s1] sm:$0xff]
    %v24 = vld [vmem:[%s1 + $0x8] sm:$0xff]
    %v25 = vld [vmem:[%s2] sm:$0xff]
    %v26 = vld [vmem:[%s2 + $0x8] sm:$0xff]
    %v27 = vld [vmem:[%s2 + $0x10] sm:$0xff]
    %v28 = vld [vmem:[%s2 + $0x18] sm:$0xff]
    %v29 = vld [vmem:[%s2 + $0x20] sm:$0xff]
    %v30 = vld [vmem:[%s2 + $0x28] sm:$0xff]
    %v31 = vld [vmem:[%s2 + $0x30] sm:$0xff]
    %v32 = vld [vmem:[%s2 + $0x38] sm:$0xff]
    %v33 = vld [vmem:[%s2 + $0x40] sm:$0xff]
    %v34 = vld [vmem:[%s2 + $0x48] sm:$0xff]
    %v35 = vld [vmem:[%s2 + $0x50] sm:$0xff]
    %v36 = vld [vmem:[%s2 + $0x58] sm:$0xff]
    %v37 = vld [vmem:[%s2 + $0x60] sm:$0xff]
    %v38 = vld [vmem:[%s2 + $0x68] sm:$0xff]
    %v39 = vld [vmem:[%s2 + $0x70] sm:$0xff]
    %v40 = vld [vmem:[%s2 + $0x78] sm:$0xff]
    %v41 = vld [vmem:[%s3] sm:$0xff]
    %42 = vmatpush.msra.mxu0 %v40
    %43 = vmatpush.msra.mxu0 %v39
    %44 = vmatpush.msra.mxu0 %v38
    %45 = vmatpush.msra.mxu0 %v37
    %46 = vmatpush.msra.mxu0 %v36
    %47 = vmatpush.msra.mxu0 %v35
    %48 = vmatpush.msra.mxu0 %v34
    %49 = vmatpush.msra.mxu0 %v33
    %50 = vmatpush.msra.mxu0 %v32
    %51 = vmatpush.msra.mxu0 %v31
    %52 = vmatpush.msra.mxu0 %v30
    %53 = vmatpush.msra.mxu0 %v29
    %54 = vmatpush.msra.mxu0 %v28
    %55 = vmatpush.msra.mxu0 %v27
    %56 = vmatpush.msra.mxu0 %v26
    %57 = vmatpush.msra.mxu0 %v25
    %58 = vmatmul.f32.gmra.mxu0 %v21
    %v59 = vpop.f32.mrf.mxu0
    %v60 = vadd.f32 0.0, %v59
    %61 = vmatmul.f32.gmra.mxu0 %v22
    %v62 = vpop.f32.mrf.mxu0
    %v63 = vadd.f32 0.0, %v62
    %64 = vdwg.mxu0
    %vm65 = vcmask 130048
    %v67 = vsel %vm65, %v41, 0
    %69 = vmatpush.msra.mxu0 0.0
    %70 = vmatpush.msra.mxu0 0.0
    %71 = vmatpush.msra.mxu0 0.0
    %72 = vmatpush.msra.mxu0 0.0
    %73 = vmatpush.msra.mxu0 0.0
    %74 = vmatpush.msra.mxu0 0.0
    %75 = vmatpush.msra.mxu0 0.0
    %76 = vmatpush.msra.mxu0 0.0
    %77 = vmatpush.msra.mxu0 0.0
    %78 = vmatpush.msra.mxu0 0.0
    %79 = vmatpush.msra.mxu0 0.0
    %80 = vmatpush.msra.mxu0 0.0
    %81 = vmatpush.msra.mxu0 0.0
    %82 = vmatpush.msra.mxu0 0.0
    %83 = vmatpush.msra.mxu0 %v63
    %84 = vmatpush.msra.mxu0 %v60
    %85 = vmatmul.f32.gmra.mxu0 %v67
    %v86 = vpop.f32.mrf.mxu0
    %v87 = vadd.f32 0.0, %v86
    %88 = vdwg.mxu0
    %89 = vmatpush.msra.mxu0 %v40
    %90 = vmatpush.msra.mxu0 %v39
    %91 = vmatpush.msra.mxu0 %v38
    %92 = vmatpush.msra.mxu0 %v37
    %93 = vmatpush.msra.mxu0 %v36
    %94 = vmatpush.msra.mxu0 %v35
    %95 = vmatpush.msra.mxu0 %v34
    %96 = vmatpush.msra.mxu0 %v33
    %97 = vmatpush.msra.mxu0 %v32
    %98 = vmatpush.msra.mxu0 %v31
    %99 = vmatpush.msra.mxu0 %v30
    %100 = vmatpush.msra.mxu0 %v29
    %101 = vmatpush.msra.mxu0 %v28
    %102 = vmatpush.msra.mxu0 %v27
    %103 = vmatpush.msra.mxu0 %v26
    %104 = vmatpush.msra.mxu0 %v25
    %105 = vmatmul.f32.gmra.mxu0 %v23
    %v106 = vpop.f32.mrf.mxu0
    %v107 = vadd.f32 0.0, %v106
    %108 = vmatmul.f32.gmra.mxu0 %v24
    %v109 = vpop.f32.mrf.mxu0
    %v110 = vadd.f32 0.0, %v109
    %111 = vdwg.mxu0
    %112 = vmatpush.msra.mxu0 0.0
    %113 = vmatpush.msra.mxu0 0.0
    %114 = vmatpush.msra.mxu0 0.0
    %115 = vmatpush.msra.mxu0 0.0
    %116 = vmatpush.msra.mxu0 0.0
    %117 = vmatpush.msra.mxu0 0.0
    %118 = vmatpush.msra.mxu0 0.0
    %119 = vmatpush.msra.mxu0 0.0
    %120 = vmatpush.msra.mxu0 0.0
    %121 = vmatpush.msra.mxu0 0.0
    %122 = vmatpush.msra.mxu0 0.0
    %123 = vmatpush.msra.mxu0 0.0
    %124 = vmatpush.msra.mxu0 0.0
    %125 = vmatpush.msra.mxu0 0.0
    %126 = vmatpush.msra.mxu0 %v110
    %127 = vmatpush.msra.mxu0 %v107
    %128 = vmatmul.f32.gmra.mxu0 %v67
    %v129 = vpop.f32.mrf.mxu0
    %v130 = vadd.f32 0.0, %v129
    %131 = vdwg.mxu0
    %v132 = vmul.f32 %v21, %v21
    %v133 = vmul.f32 %v22, %v22
    %134 = vmatpush.msra.mxu0 %v40
    %135 = vmatpush.msra.mxu0 %v39
    %136 = vmatpush.msra.mxu0 %v38
    %137 = vmatpush.msra.mxu0 %v37
    %138 = vmatpush.msra.mxu0 %v36
    %139 = vmatpush.msra.mxu0 %v35
    %140 = vmatpush.msra.mxu0 %v34
    %141 = vmatpush.msra.mxu0 %v33
    %142 = vmatpush.msra.mxu0 %v32
    %143 = vmatpush.msra.mxu0 %v31
    %144 = vmatpush.msra.mxu0 %v30
    %145 = vmatpush.msra.mxu0 %v29
    %146 = vmatpush.msra.mxu0 %v28
    %147 = vmatpush.msra.mxu0 %v27
    %148 = vmatpush.msra.mxu0 %v26
    %149 = vmatpush.msra.mxu0 %v25
    %150 = vmatmul.f32.gmra.mxu0 %v132
    %v151 = vpop.f32.mrf.mxu0
    %v152 = vadd.f32 0.0, %v151
    %153 = vmatmul.f32.gmra.mxu0 %v133
    %v154 = vpop.f32.mrf.mxu0
    %v155 = vadd.f32 0.0, %v154
    %156 = vdwg.mxu0
    %157 = vmatpush.msra.mxu0 0.0
    %158 = vmatpush.msra.mxu0 0.0
    %159 = vmatpush.msra.mxu0 0.0
    %160 = vmatpush.msra.mxu0 0.0
    %161 = vmatpush.msra.mxu0 0.0
    %162 = vmatpush.msra.mxu0 0.0
    %163 = vmatpush.msra.mxu0 0.0
    %164 = vmatpush.msra.mxu0 0.0
    %165 = vmatpush.msra.mxu0 0.0
    %166 = vmatpush.msra.mxu0 0.0
    %167 = vmatpush.msra.mxu0 0.0
    %168 = vmatpush.msra.mxu0 0.0
    %169 = vmatpush.msra.mxu0 0.0
    %170 = vmatpush.msra.mxu0 0.0
    %171 = vmatpush.msra.mxu0 %v155
    %172 = vmatpush.msra.mxu0 %v152
    %173 = vmatmul.f32.gmra.mxu0 %v67
    %v174 = vpop.f32.mrf.mxu0
    %v175 = vadd.f32 0.0, %v174
    %176 = vdwg.mxu0
    %v177 = vmul.f32 %v23, %v23
    %v178 = vmul.f32 %v24, %v24
    %179 = vmatpush.msra.mxu0 %v40
    %180 = vmatpush.msra.mxu0 %v39
    %181 = vmatpush.msra.mxu0 %v38
    %182 = vmatpush.msra.mxu0 %v37
    %183 = vmatpush.msra.mxu0 %v36
    %184 = vmatpush.msra.mxu0 %v35
    %185 = vmatpush.msra.mxu0 %v34
    %186 = vmatpush.msra.mxu0 %v33
    %187 = vmatpush.msra.mxu0 %v32
    %188 = vmatpush.msra.mxu0 %v31
    %189 = vmatpush.msra.mxu0 %v30
    %190 = vmatpush.msra.mxu0 %v29
    %191 = vmatpush.msra.mxu0 %v28
    %192 = vmatpush.msra.mxu0 %v27
    %193 = vmatpush.msra.mxu0 %v26
    %194 = vmatpush.msra.mxu0 %v25
    %195 = vmatmul.f32.gmra.mxu0 %v177
    %v196 = vpop.f32.mrf.mxu0
    %v197 = vadd.f32 0.0, %v196
    %198 = vmatmul.f32.gmra.mxu0 %v178
    %v199 = vpop.f32.mrf.mxu0
    %v200 = vadd.f32 0.0, %v199
    %201 = vdwg.mxu0
    %202 = vmatpush.msra.mxu0 0.0
    %203 = vmatpush.msra.mxu0 0.0
    %204 = vmatpush.msra.mxu0 0.0
    %205 = vmatpush.msra.mxu0 0.0
    %206 = vmatpush.msra.mxu0 0.0
    %207 = vmatpush.msra.mxu0 0.0
    %208 = vmatpush.msra.mxu0 0.0
    %209 = vmatpush.msra.mxu0 0.0
    %210 = vmatpush.msra.mxu0 0.0
    %211 = vmatpush.msra.mxu0 0.0
    %212 = vmatpush.msra.mxu0 0.0
    %213 = vmatpush.msra.mxu0 0.0
    %214 = vmatpush.msra.mxu0 0.0
    %215 = vmatpush.msra.mxu0 0.0
    %216 = vmatpush.msra.mxu0 %v200
    %217 = vmatpush.msra.mxu0 %v197
    %218 = vmatmul.f32.gmra.mxu0 %v67
    %v219 = vpop.f32.mrf.mxu0
    %v220 = vadd.f32 0.0, %v219
    %221 = vdwg.mxu0
    %v222 = vmul.f32 %v21, %v23
    %v223 = vmul.f32 %v22, %v24
    %224 = vmatpush.msra.mxu0 %v40
    %225 = vmatpush.msra.mxu0 %v39
    %226 = vmatpush.msra.mxu0 %v38
    %227 = vmatpush.msra.mxu0 %v37
    %228 = vmatpush.msra.mxu0 %v36
    %229 = vmatpush.msra.mxu0 %v35
    %230 = vmatpush.msra.mxu0 %v34
    %231 = vmatpush.msra.mxu0 %v33
    %232 = vmatpush.msra.mxu0 %v32
    %233 = vmatpush.msra.mxu0 %v31
    %234 = vmatpush.msra.mxu0 %v30
    %235 = vmatpush.msra.mxu0 %v29
    %236 = vmatpush.msra.mxu0 %v28
    %237 = vmatpush.msra.mxu0 %v27
    %238 = vmatpush.msra.mxu0 %v26
    %239 = vmatpush.msra.mxu0 %v25
    %240 = vmatmul.f32.gmra.mxu0 %v222
    %v241 = vpop.f32.mrf.mxu0
    %v242 = vadd.f32 0.0, %v241
    %243 = vmatmul.f32.gmra.mxu0 %v223
    %v244 = vpop.f32.mrf.mxu0
    %v245 = vadd.f32 0.0, %v244
    %246 = vdwg.mxu0
    %247 = vmatpush.msra.mxu0 0.0
    %248 = vmatpush.msra.mxu0 0.0
    %249 = vmatpush.msra.mxu0 0.0
    %250 = vmatpush.msra.mxu0 0.0
    %251 = vmatpush.msra.mxu0 0.0
    %252 = vmatpush.msra.mxu0 0.0
    %253 = vmatpush.msra.mxu0 0.0
    %254 = vmatpush.msra.mxu0 0.0
    %255 = vmatpush.msra.mxu0 0.0
    %256 = vmatpush.msra.mxu0 0.0
    %257 = vmatpush.msra.mxu0 0.0
    %258 = vmatpush.msra.mxu0 0.0
    %259 = vmatpush.msra.mxu0 0.0
    %260 = vmatpush.msra.mxu0 0.0
    %261 = vmatpush.msra.mxu0 %v245
    %262 = vmatpush.msra.mxu0 %v242
    %263 = vmatmul.f32.gmra.mxu0 %v67
    %v264 = vpop.f32.mrf.mxu0
    %v265 = vadd.f32 0.0, %v264
    %266 = vdwg.mxu0
    %v267 = vmul.f32 %v87, %v87
    %v268 = vmul.f32 %v130, %v130
    %v269 = vmul.f32 %v87, %v130
    %v270 = vsub.f32 %v175, %v267
    %v271 = vsub.f32 %v220, %v268
    %v272 = vsub.f32 %v265, %v269
    %v273 = vmul.f32 %v272, 2.0
    %v274 = vadd.f32 %v273, 58.5225
    %v275 = vadd.f32 %v270, %v271
    %v276 = vadd.f32 %v275, 58.5225
    %v277 = vrcp.pop %v276
    %v278 = vmul.f32 %v276, %v277
    %v279 = vsub.f32 2.0, %v278
    %v280 = vmul.f32 %v277, %v279
    %v281 = vmul.f32 %v274, %v280
    %v282 = vmul.f32 %v269, 2.0
    %v283 = vadd.f32 %v282, 6.5025
    %v284 = vadd.f32 %v267, %v268
    %v285 = vadd.f32 %v284, 6.5025
    %v286 = vrcp.pop %v285
    %v287 = vmul.f32 %v285, %v286
    %v288 = vsub.f32 2.0, %v287
    %v289 = vmul.f32 %v286, %v288
    %v290 = vmul.f32 %v283, %v289
    %v291 = vmul.f32 %v290, %v281
    %v292 = vlaneseq
    %v293 = vand.u32 %v292, 127
    %vm294 = vcmp.lt.s32.totalorder %v293, 6
    %v295 = vsel %vm294, 1, 0
    %v296 = vcvt.s32.f32 %v295
    %v297 = vld [vmem:[%s4] sm:$0xff]
    %v298 = vld [vmem:[%s4 + $0x8] sm:$0xff]
    %v299 = vld [vmem:[%s4 + $0x10] sm:$0xff]
    %v300 = vld [vmem:[%s4 + $0x18] sm:$0xff]
    %v301 = vld [vmem:[%s4 + $0x20] sm:$0xff]
    %v302 = vld [vmem:[%s4 + $0x28] sm:$0xff]
    %vm303 = vcmask 392192
    %v305 = vsel %vm303, %v291, 0
    %307 = vmatpush.msra.mxu0 0.0
    %308 = vmatpush.msra.mxu0 0.0
    %309 = vmatpush.msra.mxu0 0.0
    %310 = vmatpush.msra.mxu0 0.0
    %311 = vmatpush.msra.mxu0 0.0
    %312 = vmatpush.msra.mxu0 0.0
    %313 = vmatpush.msra.mxu0 0.0
    %314 = vmatpush.msra.mxu0 0.0
    %315 = vmatpush.msra.mxu0 0.0
    %316 = vmatpush.msra.mxu0 0.0
    %317 = vmatpush.msra.mxu0 %v302
    %318 = vmatpush.msra.mxu0 %v301
    %319 = vmatpush.msra.mxu0 %v300
    %320 = vmatpush.msra.mxu0 %v299
    %321 = vmatpush.msra.mxu0 %v298
    %322 = vmatpush.msra.mxu0 %v297
    %323 = vmatmul.f32.gmra.mxu0 %v305
    %v324 = vpop.f32.mrf.mxu0
    %v325 = vadd.f32 0.0, %v324
    %326 = vdwg.mxu0
    %vm327 = vcmask 64512
    %v329 = vsel %vm327, %v296, 0
    %331 = vmatpush.msra.mxu0 0.0
    %332 = vmatpush.msra.mxu0 0.0
    %333 = vmatpush.msra.mxu0 0.0
    %334 = vmatpush.msra.mxu0 0.0
    %335 = vmatpush.msra.mxu0 0.0
    %336 = vmatpush.msra.mxu0 0.0
    %337 = vmatpush.msra.mxu0 0.0
    %338 = vmatpush.msra.mxu0 0.0
    %339 = vmatpush.msra.mxu0 0.0
    %340 = vmatpush.msra.mxu0 0.0
    %341 = vmatpush.msra.mxu0 0.0
    %342 = vmatpush.msra.mxu0 0.0
    %343 = vmatpush.msra.mxu0 0.0
    %344 = vmatpush.msra.mxu0 0.0
    %345 = vmatpush.msra.mxu0 0.0
    %346 = vmatpush.msra.mxu0 %v325
    %347 = vmatmul.f32.gmra.mxu0 %v329
    %v348 = vpop.f32.mrf.mxu0
    %v349 = vadd.f32 0.0, %v348
    %350 = vdwg.mxu0
    %vm351 = vcmask 57344
    %352 = vst.msk [vmem:[#allocation2] sm:$0x1] %vm351, %v349
    // Predicated region
    $region22: #{tpu_custom_call.1} parent=1 // pred_check
      _
    $region23: #{tpu_custom_call.1} parent=1 // pred_check_branch
      %354 = sbr.rel (0) target = $region25
    $region24: #{tpu_custom_call.1} parent=1 // pred_region
      %356 = vsyncadd [#allocation3], 0
      %s358 = sshll.u32 [#allocation2], 4
      %s359 = int_to_ptr.vmem [resolvable:$true] %s358
      %s360 = sshll.u32 %s5, 4
      %s361 = int_to_ptr.hbm [resolvable:$true] %s360
      %363 = dma.vmem_to_hbm [thread:$0]  %s359, 16, %s361, [#allocation3]
    $region25: #{tpu_custom_call.1} parent=1 // pred_fallthru
      _
    // Predicated region
    $region26: #{tpu_custom_call.1} parent=1 // pred_check
      _
    $region27: #{tpu_custom_call.1} parent=1 // pred_check_branch
      %365 = sbr.rel (0) target = $region29
    $region28: #{tpu_custom_call.1} parent=1 // pred_region
      %367 = dma.done [#allocation3], 16
    $region29: #{tpu_custom_call.1} parent=1 // pred_fallthru
      _
    %368 = vsyncpa [#allocation3], 1

</llo_original>
